<compile_context>
chip_gen: v6e
topology: v6e:2x2x1
jax: 0.10.0
libtpu: 0.0.40
codegen_flags: <defaults>
</compile_context>

<pallas_src>
import jax
import jax.numpy as jnp
from jax.experimental import pallas as pl
from jax.experimental.pallas import tpu as pltpu


def _affine_vpu(w, x, b):
    """y = w @ x + b unrolled into VPU broadcast-FMAs (no MXU).

    w: (out_f, in_f), x: (in_f, TB), b: (out_f, 1)  ->  (out_f, TB)
    """
    _, in_f = w.shape
    acc = w[:, 0:1] * x[0:1, :]
    for k in range(1, in_f):
        acc = acc + w[:, k:k + 1] * x[k:k + 1, :]
    return acc + b


def _mlp_kernel(x_ref,
                w1_ref, b1_ref,
                w2_ref, b2_ref,
                w3_ref, b3_ref,
                w4_ref, b4_ref,
                o_ref):
    x = x_ref[...]                                                     # (1, TB)

    # Layer 1: Linear(1, 16) + ReLU — contraction dim 1 => pure broadcast FMA.
    h1 = jnp.maximum(w1_ref[...] * x + b1_ref[...], 0.0)               # (16, TB)

    # Layer 2: Linear(16, 8) + ReLU
    h2 = jnp.maximum(_affine_vpu(w2_ref[...], h1, b2_ref[...]), 0.0)   # (8, TB)

    # Layer 3: Linear(8, 4) + ReLU
    h3 = jnp.maximum(_affine_vpu(w3_ref[...], h2, b3_ref[...]), 0.0)   # (4, TB)

    # Layer 4: Linear(4, 1), no activation
    out = _affine_vpu(w4_ref[...], h3, b4_ref[...])                    # (1, TB)

    o_ref[...] = out.astype(o_ref.dtype)


def relu_controller_forward(e, params, *, tb=512):
    """Apply the ReLU controller MLP to e of shape (B, 1) -> (B, 1)."""
    (w1, b1), (w2, b2), (w3, b3), (w4, b4) = params
    B = e.shape[0]

    # Feature-major, lane-dense layout: batch on the lane axis.
    x = e.reshape(1, B).astype(jnp.float32)

    num_tiles = pl.cdiv(B, tb)
    b_pad = num_tiles * tb
    if b_pad != B:
        x = jnp.pad(x, ((0, 0), (0, b_pad - B)))

    # Biases as (out_f, 1) columns so they broadcast along lanes in the kernel.
    col = lambda v: v.reshape(-1, 1).astype(jnp.float32)
    b1c, b2c, b3c, b4c = col(b1), col(b2), col(b3), col(b4)
    f32 = lambda v: v.astype(jnp.float32)

    # Full-array, VMEM-resident blocks for all params (constant index_map =>
    # DMA'd once, not re-fetched per grid step).
    resident = lambda a: pl.BlockSpec(a.shape, lambda i: (0, 0))

    out = pl.pallas_call(
        _mlp_kernel,
        out_shape=jax.ShapeDtypeStruct((1, b_pad), jnp.float32),
        grid=(num_tiles,),
        in_specs=[pl.BlockSpec((1, tb), lambda i: (0, i)),
                  resident(w1), resident(b1c),
                  resident(w2), resident(b2c),
                  resident(w3), resident(b3c),
                  resident(w4), resident(b4c)],
        out_specs=pl.BlockSpec((1, tb), lambda i: (0, i)),
        compiler_params=pltpu.CompilerParams(
            dimension_semantics=("parallel",)),
        cost_estimate=pl.CostEstimate(flops=58 * b_pad,
                                      transcendentals=0,
                                      bytes_accessed=8 * b_pad),
    )(x, f32(w1), b1c, f32(w2), b2c, f32(w3), b3c, f32(w4), b4c)

    return out[:, :B].reshape(B, 1)


def init_params(key):
    """Deterministic init mimicking nn.Linear defaults: U(-1/sqrt(fan_in), +).

    Weights are stored in PyTorch layout (out_features, in_features),
    biases as (out_features,).
    """
    dims = [(1, 16), (16, 8), (8, 4), (4, 1)]
    params = []
    for fan_in, fan_out in dims:
        key, kw, kb = jax.random.split(key, 3)
        bound = 1.0 / (fan_in ** 0.5)
        w = jax.random.uniform(kw, (fan_out, fan_in), jnp.float32, -bound, bound)
        b = jax.random.uniform(kb, (fan_out,), jnp.float32, -bound, bound)
        params.append((w, b))
    return params


def reference_forward(e, params):
    (w1, b1), (w2, b2), (w3, b3), (w4, b4) = params
    h = jnp.maximum(e @ w1.T + b1, 0.0)
    h = jnp.maximum(h @ w2.T + b2, 0.0)
    h = jnp.maximum(h @ w3.T + b3, 0.0)
    return h @ w4.T + b4


if __name__ == "__main__":
    key = jax.random.PRNGKey(0)
    kp, ke = jax.random.split(key)

    params = init_params(kp)

    # values = {'e': batch of scalar errors}. B deliberately not a multiple of
    # the lane tile so the padding / multi-tile grid path is exercised.
    B = 1000
    e = jax.random.normal(ke, (B, 1), dtype=jnp.float32)

    out = relu_controller_forward(e, params, tb=256)
    out = jax.block_until_ready(out)

    ref = reference_forward(e, params)
    assert out.shape == (B, 1)
    assert jnp.allclose(out, ref, atol=2e-5, rtol=1e-5), (out[:4], ref[:4])

    print("KERNEL_OK")
</pallas_src>

<mosaic_0001>
module attributes {stable_mosaic.version = 11 : i64} {
  func.func @_mlp_kernel(%arg0: i32, %arg1: memref<1x256xf32, #tpu.memory_space<vmem>>, %arg2: memref<16x1xf32, #tpu.memory_space<vmem>>, %arg3: memref<16x1xf32, #tpu.memory_space<vmem>>, %arg4: memref<8x16xf32, #tpu.memory_space<vmem>>, %arg5: memref<8x1xf32, #tpu.memory_space<vmem>>, %arg6: memref<4x8xf32, #tpu.memory_space<vmem>>, %arg7: memref<4x1xf32, #tpu.memory_space<vmem>>, %arg8: memref<1x4xf32, #tpu.memory_space<vmem>>, %arg9: memref<1x1xf32, #tpu.memory_space<vmem>>, %arg10: memref<1x256xf32, #tpu.memory_space<vmem>>) attributes {dimension_semantics = [#tpu.dimension_semantics<parallel>], iteration_bounds = array<i64: 4>, scalar_prefetch = 0 : i64, scratch_operands = 0 : i64, tpu.core_type = #tpu.core_type<tc>, window_params = [{transform_indices = @transform_0, window_bounds = array<i64: 1, 256>}, {pipeline_mode = #tpu.pipeline_mode<synchronous>, transform_indices = @transform_1, window_bounds = array<i64: 16, 1>}, {pipeline_mode = #tpu.pipeline_mode<synchronous>, transform_indices = @transform_2, window_bounds = array<i64: 16, 1>}, {pipeline_mode = #tpu.pipeline_mode<synchronous>, transform_indices = @transform_3, window_bounds = array<i64: 8, 16>}, {pipeline_mode = #tpu.pipeline_mode<synchronous>, transform_indices = @transform_4, window_bounds = array<i64: 8, 1>}, {pipeline_mode = #tpu.pipeline_mode<synchronous>, transform_indices = @transform_5, window_bounds = array<i64: 4, 8>}, {pipeline_mode = #tpu.pipeline_mode<synchronous>, transform_indices = @transform_6, window_bounds = array<i64: 4, 1>}, {pipeline_mode = #tpu.pipeline_mode<synchronous>, transform_indices = @transform_7, window_bounds = array<i64: 1, 4>}, {pipeline_mode = #tpu.pipeline_mode<synchronous>, transform_indices = @transform_8, window_bounds = array<i64: 1, 1>}, {transform_indices = @transform_9, window_bounds = array<i64: 1, 256>}]} {
    %c0 = arith.constant 0 : index
    %c0_0 = arith.constant 0 : index
    %0 = vector.load %arg1[%c0, %c0_0] : memref<1x256xf32, #tpu.memory_space<vmem>>, vector<1x256xf32>
    %c0_1 = arith.constant 0 : index
    %c0_2 = arith.constant 0 : index
    %1 = vector.load %arg2[%c0_1, %c0_2] : memref<16x1xf32, #tpu.memory_space<vmem>>, vector<16x1xf32>
    %2 = vector.broadcast %1 : vector<16x1xf32> to vector<16x256xf32>
    %3 = vector.broadcast %0 : vector<1x256xf32> to vector<16x256xf32>
    %4 = arith.mulf %2, %3 : vector<16x256xf32>
    %c0_3 = arith.constant 0 : index
    %c0_4 = arith.constant 0 : index
    %5 = vector.load %arg3[%c0_3, %c0_4] : memref<16x1xf32, #tpu.memory_space<vmem>>, vector<16x1xf32>
    %6 = vector.broadcast %5 : vector<16x1xf32> to vector<16x256xf32>
    %7 = arith.addf %4, %6 : vector<16x256xf32>
    %cst = arith.constant 0.000000e+00 : f32
    %8 = vector.broadcast %cst : f32 to vector<16x256xf32>
    %9 = arith.maximumf %7, %8 : vector<16x256xf32>
    %c0_5 = arith.constant 0 : index
    %c0_6 = arith.constant 0 : index
    %10 = vector.load %arg4[%c0_5, %c0_6] : memref<8x16xf32, #tpu.memory_space<vmem>>, vector<8x16xf32>
    %c0_7 = arith.constant 0 : index
    %c0_8 = arith.constant 0 : index
    %11 = vector.load %arg5[%c0_7, %c0_8] : memref<8x1xf32, #tpu.memory_space<vmem>>, vector<8x1xf32>
    %12 = vector.extract_strided_slice %10 {offsets = [0, 0], sizes = [8, 1], strides = [1, 1]} : vector<8x16xf32> to vector<8x1xf32>
    %13 = vector.extract_strided_slice %9 {offsets = [0, 0], sizes = [1, 256], strides = [1, 1]} : vector<16x256xf32> to vector<1x256xf32>
    %14 = vector.broadcast %12 : vector<8x1xf32> to vector<8x256xf32>
    %15 = vector.broadcast %13 : vector<1x256xf32> to vector<8x256xf32>
    %16 = arith.mulf %14, %15 : vector<8x256xf32>
    %17 = vector.extract_strided_slice %10 {offsets = [0, 1], sizes = [8, 1], strides = [1, 1]} : vector<8x16xf32> to vector<8x1xf32>
    %18 = vector.extract_strided_slice %9 {offsets = [1, 0], sizes = [1, 256], strides = [1, 1]} : vector<16x256xf32> to vector<1x256xf32>
    %19 = vector.broadcast %17 : vector<8x1xf32> to vector<8x256xf32>
    %20 = vector.broadcast %18 : vector<1x256xf32> to vector<8x256xf32>
    %21 = arith.mulf %19, %20 : vector<8x256xf32>
    %22 = arith.addf %16, %21 : vector<8x256xf32>
    %23 = vector.extract_strided_slice %10 {offsets = [0, 2], sizes = [8, 1], strides = [1, 1]} : vector<8x16xf32> to vector<8x1xf32>
    %24 = vector.extract_strided_slice %9 {offsets = [2, 0], sizes = [1, 256], strides = [1, 1]} : vector<16x256xf32> to vector<1x256xf32>
    %25 = vector.broadcast %23 : vector<8x1xf32> to vector<8x256xf32>
    %26 = vector.broadcast %24 : vector<1x256xf32> to vector<8x256xf32>
    %27 = arith.mulf %25, %26 : vector<8x256xf32>
    %28 = arith.addf %22, %27 : vector<8x256xf32>
    %29 = vector.extract_strided_slice %10 {offsets = [0, 3], sizes = [8, 1], strides = [1, 1]} : vector<8x16xf32> to vector<8x1xf32>
    %30 = vector.extract_strided_slice %9 {offsets = [3, 0], sizes = [1, 256], strides = [1, 1]} : vector<16x256xf32> to vector<1x256xf32>
    %31 = vector.broadcast %29 : vector<8x1xf32> to vector<8x256xf32>
    %32 = vector.broadcast %30 : vector<1x256xf32> to vector<8x256xf32>
    %33 = arith.mulf %31, %32 : vector<8x256xf32>
    %34 = arith.addf %28, %33 : vector<8x256xf32>
    %35 = vector.extract_strided_slice %10 {offsets = [0, 4], sizes = [8, 1], strides = [1, 1]} : vector<8x16xf32> to vector<8x1xf32>
    %36 = vector.extract_strided_slice %9 {offsets = [4, 0], sizes = [1, 256], strides = [1, 1]} : vector<16x256xf32> to vector<1x256xf32>
    %37 = vector.broadcast %35 : vector<8x1xf32> to vector<8x256xf32>
    %38 = vector.broadcast %36 : vector<1x256xf32> to vector<8x256xf32>
    %39 = arith.mulf %37, %38 : vector<8x256xf32>
    %40 = arith.addf %34, %39 : vector<8x256xf32>
    %41 = vector.extract_strided_slice %10 {offsets = [0, 5], sizes = [8, 1], strides = [1, 1]} : vector<8x16xf32> to vector<8x1xf32>
    %42 = vector.extract_strided_slice %9 {offsets = [5, 0], sizes = [1, 256], strides = [1, 1]} : vector<16x256xf32> to vector<1x256xf32>
    %43 = vector.broadcast %41 : vector<8x1xf32> to vector<8x256xf32>
    %44 = vector.broadcast %42 : vector<1x256xf32> to vector<8x256xf32>
    %45 = arith.mulf %43, %44 : vector<8x256xf32>
    %46 = arith.addf %40, %45 : vector<8x256xf32>
    %47 = vector.extract_strided_slice %10 {offsets = [0, 6], sizes = [8, 1], strides = [1, 1]} : vector<8x16xf32> to vector<8x1xf32>
    %48 = vector.extract_strided_slice %9 {offsets = [6, 0], sizes = [1, 256], strides = [1, 1]} : vector<16x256xf32> to vector<1x256xf32>
    %49 = vector.broadcast %47 : vector<8x1xf32> to vector<8x256xf32>
    %50 = vector.broadcast %48 : vector<1x256xf32> to vector<8x256xf32>
    %51 = arith.mulf %49, %50 : vector<8x256xf32>
    %52 = arith.addf %46, %51 : vector<8x256xf32>
    %53 = vector.extract_strided_slice %10 {offsets = [0, 7], sizes = [8, 1], strides = [1, 1]} : vector<8x16xf32> to vector<8x1xf32>
    %54 = vector.extract_strided_slice %9 {offsets = [7, 0], sizes = [1, 256], strides = [1, 1]} : vector<16x256xf32> to vector<1x256xf32>
    %55 = vector.broadcast %53 : vector<8x1xf32> to vector<8x256xf32>
    %56 = vector.broadcast %54 : vector<1x256xf32> to vector<8x256xf32>
    %57 = arith.mulf %55, %56 : vector<8x256xf32>
    %58 = arith.addf %52, %57 : vector<8x256xf32>
    %59 = vector.extract_strided_slice %10 {offsets = [0, 8], sizes = [8, 1], strides = [1, 1]} : vector<8x16xf32> to vector<8x1xf32>
    %60 = vector.extract_strided_slice %9 {offsets = [8, 0], sizes = [1, 256], strides = [1, 1]} : vector<16x256xf32> to vector<1x256xf32>
    %61 = vector.broadcast %59 : vector<8x1xf32> to vector<8x256xf32>
    %62 = vector.broadcast %60 : vector<1x256xf32> to vector<8x256xf32>
    %63 = arith.mulf %61, %62 : vector<8x256xf32>
    %64 = arith.addf %58, %63 : vector<8x256xf32>
    %65 = vector.extract_strided_slice %10 {offsets = [0, 9], sizes = [8, 1], strides = [1, 1]} : vector<8x16xf32> to vector<8x1xf32>
    %66 = vector.extract_strided_slice %9 {offsets = [9, 0], sizes = [1, 256], strides = [1, 1]} : vector<16x256xf32> to vector<1x256xf32>
    %67 = vector.broadcast %65 : vector<8x1xf32> to vector<8x256xf32>
    %68 = vector.broadcast %66 : vector<1x256xf32> to vector<8x256xf32>
    %69 = arith.mulf %67, %68 : vector<8x256xf32>
    %70 = arith.addf %64, %69 : vector<8x256xf32>
    %71 = vector.extract_strided_slice %10 {offsets = [0, 10], sizes = [8, 1], strides = [1, 1]} : vector<8x16xf32> to vector<8x1xf32>
    %72 = vector.extract_strided_slice %9 {offsets = [10, 0], sizes = [1, 256], strides = [1, 1]} : vector<16x256xf32> to vector<1x256xf32>
    %73 = vector.broadcast %71 : vector<8x1xf32> to vector<8x256xf32>
    %74 = vector.broadcast %72 : vector<1x256xf32> to vector<8x256xf32>
    %75 = arith.mulf %73, %74 : vector<8x256xf32>
    %76 = arith.addf %70, %75 : vector<8x256xf32>
    %77 = vector.extract_strided_slice %10 {offsets = [0, 11], sizes = [8, 1], strides = [1, 1]} : vector<8x16xf32> to vector<8x1xf32>
    %78 = vector.extract_strided_slice %9 {offsets = [11, 0], sizes = [1, 256], strides = [1, 1]} : vector<16x256xf32> to vector<1x256xf32>
    %79 = vector.broadcast %77 : vector<8x1xf32> to vector<8x256xf32>
    %80 = vector.broadcast %78 : vector<1x256xf32> to vector<8x256xf32>
    %81 = arith.mulf %79, %80 : vector<8x256xf32>
    %82 = arith.addf %76, %81 : vector<8x256xf32>
    %83 = vector.extract_strided_slice %10 {offsets = [0, 12], sizes = [8, 1], strides = [1, 1]} : vector<8x16xf32> to vector<8x1xf32>
    %84 = vector.extract_strided_slice %9 {offsets = [12, 0], sizes = [1, 256], strides = [1, 1]} : vector<16x256xf32> to vector<1x256xf32>
    %85 = vector.broadcast %83 : vector<8x1xf32> to vector<8x256xf32>
    %86 = vector.broadcast %84 : vector<1x256xf32> to vector<8x256xf32>
    %87 = arith.mulf %85, %86 : vector<8x256xf32>
    %88 = arith.addf %82, %87 : vector<8x256xf32>
    %89 = vector.extract_strided_slice %10 {offsets = [0, 13], sizes = [8, 1], strides = [1, 1]} : vector<8x16xf32> to vector<8x1xf32>
    %90 = vector.extract_strided_slice %9 {offsets = [13, 0], sizes = [1, 256], strides = [1, 1]} : vector<16x256xf32> to vector<1x256xf32>
    %91 = vector.broadcast %89 : vector<8x1xf32> to vector<8x256xf32>
    %92 = vector.broadcast %90 : vector<1x256xf32> to vector<8x256xf32>
    %93 = arith.mulf %91, %92 : vector<8x256xf32>
    %94 = arith.addf %88, %93 : vector<8x256xf32>
    %95 = vector.extract_strided_slice %10 {offsets = [0, 14], sizes = [8, 1], strides = [1, 1]} : vector<8x16xf32> to vector<8x1xf32>
    %96 = vector.extract_strided_slice %9 {offsets = [14, 0], sizes = [1, 256], strides = [1, 1]} : vector<16x256xf32> to vector<1x256xf32>
    %97 = vector.broadcast %95 : vector<8x1xf32> to vector<8x256xf32>
    %98 = vector.broadcast %96 : vector<1x256xf32> to vector<8x256xf32>
    %99 = arith.mulf %97, %98 : vector<8x256xf32>
    %100 = arith.addf %94, %99 : vector<8x256xf32>
    %101 = vector.extract_strided_slice %10 {offsets = [0, 15], sizes = [8, 1], strides = [1, 1]} : vector<8x16xf32> to vector<8x1xf32>
    %102 = vector.extract_strided_slice %9 {offsets = [15, 0], sizes = [1, 256], strides = [1, 1]} : vector<16x256xf32> to vector<1x256xf32>
    %103 = vector.broadcast %101 : vector<8x1xf32> to vector<8x256xf32>
    %104 = vector.broadcast %102 : vector<1x256xf32> to vector<8x256xf32>
    %105 = arith.mulf %103, %104 : vector<8x256xf32>
    %106 = arith.addf %100, %105 : vector<8x256xf32>
    %107 = vector.broadcast %11 : vector<8x1xf32> to vector<8x256xf32>
    %108 = arith.addf %106, %107 : vector<8x256xf32>
    %cst_9 = arith.constant 0.000000e+00 : f32
    %109 = vector.broadcast %cst_9 : f32 to vector<8x256xf32>
    %110 = arith.maximumf %108, %109 : vector<8x256xf32>
    %c0_10 = arith.constant 0 : index
    %c0_11 = arith.constant 0 : index
    %111 = vector.load %arg6[%c0_10, %c0_11] : memref<4x8xf32, #tpu.memory_space<vmem>>, vector<4x8xf32>
    %c0_12 = arith.constant 0 : index
    %c0_13 = arith.constant 0 : index
    %112 = vector.load %arg7[%c0_12, %c0_13] : memref<4x1xf32, #tpu.memory_space<vmem>>, vector<4x1xf32>
    %113 = vector.extract_strided_slice %111 {offsets = [0, 0], sizes = [4, 1], strides = [1, 1]} : vector<4x8xf32> to vector<4x1xf32>
    %114 = vector.extract_strided_slice %110 {offsets = [0, 0], sizes = [1, 256], strides = [1, 1]} : vector<8x256xf32> to vector<1x256xf32>
    %115 = vector.broadcast %113 : vector<4x1xf32> to vector<4x256xf32>
    %116 = vector.broadcast %114 : vector<1x256xf32> to vector<4x256xf32>
    %117 = arith.mulf %115, %116 : vector<4x256xf32>
    %118 = vector.extract_strided_slice %111 {offsets = [0, 1], sizes = [4, 1], strides = [1, 1]} : vector<4x8xf32> to vector<4x1xf32>
    %119 = vector.extract_strided_slice %110 {offsets = [1, 0], sizes = [1, 256], strides = [1, 1]} : vector<8x256xf32> to vector<1x256xf32>
    %120 = vector.broadcast %118 : vector<4x1xf32> to vector<4x256xf32>
    %121 = vector.broadcast %119 : vector<1x256xf32> to vector<4x256xf32>
    %122 = arith.mulf %120, %121 : vector<4x256xf32>
    %123 = arith.addf %117, %122 : vector<4x256xf32>
    %124 = vector.extract_strided_slice %111 {offsets = [0, 2], sizes = [4, 1], strides = [1, 1]} : vector<4x8xf32> to vector<4x1xf32>
    %125 = vector.extract_strided_slice %110 {offsets = [2, 0], sizes = [1, 256], strides = [1, 1]} : vector<8x256xf32> to vector<1x256xf32>
    %126 = vector.broadcast %124 : vector<4x1xf32> to vector<4x256xf32>
    %127 = vector.broadcast %125 : vector<1x256xf32> to vector<4x256xf32>
    %128 = arith.mulf %126, %127 : vector<4x256xf32>
    %129 = arith.addf %123, %128 : vector<4x256xf32>
    %130 = vector.extract_strided_slice %111 {offsets = [0, 3], sizes = [4, 1], strides = [1, 1]} : vector<4x8xf32> to vector<4x1xf32>
    %131 = vector.extract_strided_slice %110 {offsets = [3, 0], sizes = [1, 256], strides = [1, 1]} : vector<8x256xf32> to vector<1x256xf32>
    %132 = vector.broadcast %130 : vector<4x1xf32> to vector<4x256xf32>
    %133 = vector.broadcast %131 : vector<1x256xf32> to vector<4x256xf32>
    %134 = arith.mulf %132, %133 : vector<4x256xf32>
    %135 = arith.addf %129, %134 : vector<4x256xf32>
    %136 = vector.extract_strided_slice %111 {offsets = [0, 4], sizes = [4, 1], strides = [1, 1]} : vector<4x8xf32> to vector<4x1xf32>
    %137 = vector.extract_strided_slice %110 {offsets = [4, 0], sizes = [1, 256], strides = [1, 1]} : vector<8x256xf32> to vector<1x256xf32>
    %138 = vector.broadcast %136 : vector<4x1xf32> to vector<4x256xf32>
    %139 = vector.broadcast %137 : vector<1x256xf32> to vector<4x256xf32>
    %140 = arith.mulf %138, %139 : vector<4x256xf32>
    %141 = arith.addf %135, %140 : vector<4x256xf32>
    %142 = vector.extract_strided_slice %111 {offsets = [0, 5], sizes = [4, 1], strides = [1, 1]} : vector<4x8xf32> to vector<4x1xf32>
    %143 = vector.extract_strided_slice %110 {offsets = [5, 0], sizes = [1, 256], strides = [1, 1]} : vector<8x256xf32> to vector<1x256xf32>
    %144 = vector.broadcast %142 : vector<4x1xf32> to vector<4x256xf32>
    %145 = vector.broadcast %143 : vector<1x256xf32> to vector<4x256xf32>
    %146 = arith.mulf %144, %145 : vector<4x256xf32>
    %147 = arith.addf %141, %146 : vector<4x256xf32>
    %148 = vector.extract_strided_slice %111 {offsets = [0, 6], sizes = [4, 1], strides = [1, 1]} : vector<4x8xf32> to vector<4x1xf32>
    %149 = vector.extract_strided_slice %110 {offsets = [6, 0], sizes = [1, 256], strides = [1, 1]} : vector<8x256xf32> to vector<1x256xf32>
    %150 = vector.broadcast %148 : vector<4x1xf32> to vector<4x256xf32>
    %151 = vector.broadcast %149 : vector<1x256xf32> to vector<4x256xf32>
    %152 = arith.mulf %150, %151 : vector<4x256xf32>
    %153 = arith.addf %147, %152 : vector<4x256xf32>
    %154 = vector.extract_strided_slice %111 {offsets = [0, 7], sizes = [4, 1], strides = [1, 1]} : vector<4x8xf32> to vector<4x1xf32>
    %155 = vector.extract_strided_slice %110 {offsets = [7, 0], sizes = [1, 256], strides = [1, 1]} : vector<8x256xf32> to vector<1x256xf32>
    %156 = vector.broadcast %154 : vector<4x1xf32> to vector<4x256xf32>
    %157 = vector.broadcast %155 : vector<1x256xf32> to vector<4x256xf32>
    %158 = arith.mulf %156, %157 : vector<4x256xf32>
    %159 = arith.addf %153, %158 : vector<4x256xf32>
    %160 = vector.broadcast %112 : vector<4x1xf32> to vector<4x256xf32>
    %161 = arith.addf %159, %160 : vector<4x256xf32>
    %cst_14 = arith.constant 0.000000e+00 : f32
    %162 = vector.broadcast %cst_14 : f32 to vector<4x256xf32>
    %163 = arith.maximumf %161, %162 : vector<4x256xf32>
    %c0_15 = arith.constant 0 : index
    %c0_16 = arith.constant 0 : index
    %164 = vector.load %arg8[%c0_15, %c0_16] : memref<1x4xf32, #tpu.memory_space<vmem>>, vector<1x4xf32>
    %c0_17 = arith.constant 0 : index
    %c0_18 = arith.constant 0 : index
    %165 = vector.load %arg9[%c0_17, %c0_18] : memref<1x1xf32, #tpu.memory_space<vmem>>, vector<1x1xf32>
    %166 = vector.extract_strided_slice %164 {offsets = [0, 0], sizes = [1, 1], strides = [1, 1]} : vector<1x4xf32> to vector<1x1xf32>
    %167 = vector.extract_strided_slice %163 {offsets = [0, 0], sizes = [1, 256], strides = [1, 1]} : vector<4x256xf32> to vector<1x256xf32>
    %168 = vector.broadcast %166 : vector<1x1xf32> to vector<1x256xf32>
    %169 = arith.mulf %168, %167 : vector<1x256xf32>
    %170 = vector.extract_strided_slice %164 {offsets = [0, 1], sizes = [1, 1], strides = [1, 1]} : vector<1x4xf32> to vector<1x1xf32>
    %171 = vector.extract_strided_slice %163 {offsets = [1, 0], sizes = [1, 256], strides = [1, 1]} : vector<4x256xf32> to vector<1x256xf32>
    %172 = vector.broadcast %170 : vector<1x1xf32> to vector<1x256xf32>
    %173 = arith.mulf %172, %171 : vector<1x256xf32>
    %174 = arith.addf %169, %173 : vector<1x256xf32>
    %175 = vector.extract_strided_slice %164 {offsets = [0, 2], sizes = [1, 1], strides = [1, 1]} : vector<1x4xf32> to vector<1x1xf32>
    %176 = vector.extract_strided_slice %163 {offsets = [2, 0], sizes = [1, 256], strides = [1, 1]} : vector<4x256xf32> to vector<1x256xf32>
    %177 = vector.broadcast %175 : vector<1x1xf32> to vector<1x256xf32>
    %178 = arith.mulf %177, %176 : vector<1x256xf32>
    %179 = arith.addf %174, %178 : vector<1x256xf32>
    %180 = vector.extract_strided_slice %164 {offsets = [0, 3], sizes = [1, 1], strides = [1, 1]} : vector<1x4xf32> to vector<1x1xf32>
    %181 = vector.extract_strided_slice %163 {offsets = [3, 0], sizes = [1, 256], strides = [1, 1]} : vector<4x256xf32> to vector<1x256xf32>
    %182 = vector.broadcast %180 : vector<1x1xf32> to vector<1x256xf32>
    %183 = arith.mulf %182, %181 : vector<1x256xf32>
    %184 = arith.addf %179, %183 : vector<1x256xf32>
    %185 = vector.broadcast %165 : vector<1x1xf32> to vector<1x256xf32>
    %186 = arith.addf %184, %185 : vector<1x256xf32>
    %c0_19 = arith.constant 0 : index
    %c0_20 = arith.constant 0 : index
    %187 = vector.load %arg10[%c0_19, %c0_20] : memref<1x256xf32, #tpu.memory_space<vmem>>, vector<1x256xf32>
    tpu.vector_store %arg10[%c0_19, %c0_20], %186 {strides = array<i32>} : memref<1x256xf32, #tpu.memory_space<vmem>>, vector<1x256xf32>,
    return
  }
  func.func @transform_0(%arg0: i32) -> (i32, i32) {
    %c0_i32 = arith.constant 0 : i32
    %c0_i32_0 = arith.constant 0 : i32
    return %c0_i32, %arg0 : i32, i32
  }
  func.func @transform_1(%arg0: i32) -> (i32, i32) {
    %c0_i32 = arith.constant 0 : i32
    %c0_i32_0 = arith.constant 0 : i32
    %c0_i32_1 = arith.constant 0 : i32
    return %c0_i32, %c0_i32_0 : i32, i32
  }
  func.func @transform_2(%arg0: i32) -> (i32, i32) {
    %c0_i32 = arith.constant 0 : i32
    %c0_i32_0 = arith.constant 0 : i32
    %c0_i32_1 = arith.constant 0 : i32
    return %c0_i32, %c0_i32_0 : i32, i32
  }
  func.func @transform_3(%arg0: i32) -> (i32, i32) {
    %c0_i32 = arith.constant 0 : i32
    %c0_i32_0 = arith.constant 0 : i32
    %c0_i32_1 = arith.constant 0 : i32
    return %c0_i32, %c0_i32_0 : i32, i32
  }
  func.func @transform_4(%arg0: i32) -> (i32, i32) {
    %c0_i32 = arith.constant 0 : i32
    %c0_i32_0 = arith.constant 0 : i32
    %c0_i32_1 = arith.constant 0 : i32
    return %c0_i32, %c0_i32_0 : i32, i32
  }
  func.func @transform_5(%arg0: i32) -> (i32, i32) {
    %c0_i32 = arith.constant 0 : i32
    %c0_i32_0 = arith.constant 0 : i32
    %c0_i32_1 = arith.constant 0 : i32
    return %c0_i32, %c0_i32_0 : i32, i32
  }
  func.func @transform_6(%arg0: i32) -> (i32, i32) {
    %c0_i32 = arith.constant 0 : i32
    %c0_i32_0 = arith.constant 0 : i32
    %c0_i32_1 = arith.constant 0 : i32
    return %c0_i32, %c0_i32_0 : i32, i32
  }
  func.func @transform_7(%arg0: i32) -> (i32, i32) {
    %c0_i32 = arith.constant 0 : i32
    %c0_i32_0 = arith.constant 0 : i32
    %c0_i32_1 = arith.constant 0 : i32
    return %c0_i32, %c0_i32_0 : i32, i32
  }
  func.func @transform_8(%arg0: i32) -> (i32, i32) {
    %c0_i32 = arith.constant 0 : i32
    %c0_i32_0 = arith.constant 0 : i32
    %c0_i32_1 = arith.constant 0 : i32
    return %c0_i32, %c0_i32_0 : i32, i32
  }
  func.func @transform_9(%arg0: i32) -> (i32, i32) {
    %c0_i32 = arith.constant 0 : i32
    %c0_i32_0 = arith.constant 0 : i32
    return %c0_i32, %arg0 : i32, i32
  }
}

</mosaic_0001>

<llo_original>
// kernel: tpu_custom_call.1
$region0: #{tpu_custom_call.1}
  #allocation0 [shape = 'u32[]', space=smem, size = 0x4, offset = 0x4, fixed_abs, tag = 'smem constant byte address 0x4 - core index']
  #allocation1 [shape = 'u32[144,128]{1,0:T(1,128)}', space=vmem, size = 0x12000, scoped, tag = 'internal scratch']
  #allocation2 [shape = 'f32[1,1]{1,0:T(1,128)S(1)}', space=vmem, size = 0x200, scoped, tag = 'scoped memory for tpu_custom_call.1']
  %s0 = inlined_call_operand.vmem [shape: f32[1,1024], index: 0, kind: input, shape index: {}]
  %s1 = inlined_call_operand.vmem [shape: f32[16,1], index: 1, kind: input, shape index: {}]
  %s2 = inlined_call_operand.vmem [shape: f32[16,1], index: 2, kind: input, shape index: {}]
  %s3 = inlined_call_operand.vmem [shape: f32[8,16], index: 3, kind: input, shape index: {}]
  %s4 = inlined_call_operand.vmem [shape: f32[8,1], index: 4, kind: input, shape index: {}]
  %s5 = inlined_call_operand.vmem [shape: f32[4,8], index: 5, kind: input, shape index: {}]
  %s6 = inlined_call_operand.vmem [shape: f32[4,1], index: 6, kind: input, shape index: {}]
  %s7 = inlined_call_operand.vmem [shape: f32[1,4], index: 7, kind: input, shape index: {}]
  %s8 = inlined_call_operand.<no memory space> [shape: f32[1,1], index: 8, kind: input, shape index: {}]
  %s9 = inlined_call_operand.hbm [shape: f32[1,1024], index: 9, kind: output, shape index: {}]
  %s10 = sld [smem:[#allocation0]]
  $region69: #{tpu_custom_call.1} parent=0
    _
  %s12 = ssub.s32 1, %s10
  %s13 = scalar_select 0, %s12, %s10
  %v14 = vstv %s8
  %15 = vst [vmem:[#allocation2] sm:$0x1] %v14
  $region1: #{tpu_custom_call.1} parent=0
    #allocation3 [shape = 'u8[2048]{0}', space=vmem, size = 0x800, scoped, tag = 'output window, operand 0']
    #allocation4 [shape = 's32[2]{0}', space=sflag, size = 0x8, scoped, tag = 'scoped memory for tpu_custom_call.1']
    %16 = vsyncpa [#allocation4], 0
    %s17 = scalar_lea.sflag [#allocation4], 1
    %18 = vsyncpa %s17, 0
    loop: start=0, step=1, limit=6
    $region2: #{tpu_custom_call.1} parent=1 // loop_pre_header
      _
    $region3: #{tpu_custom_call.1} parent=1 // loop_header
      %s20 = sphi 0, %s24
      %p21 = scmp.ge.s32.totalorder %s20, 6
      %s30 = sphi 0, %s32
      %s33 = sphi 0, %s30
      %s34 = sphi 0, %s33
      %s50 = sphi 0, %s34
      %s54 = sphi 0, %s54
      %s56 = sphi 0, %s54
      %s57 = sphi 0, %s56
      %s71 = sphi 0, %s57
      %s75 = sphi 0, %s75
      %s77 = sphi 0, %s75
      %s78 = sphi 0, %s77
      %s92 = sphi 0, %s78
      %s96 = sphi 0, %s96
      %s98 = sphi 0, %s96
      %s99 = sphi 0, %s98
      %s113 = sphi 0, %s99
      %s117 = sphi 0, %s117
      %s119 = sphi 0, %s117
      %s120 = sphi 0, %s119
      %s134 = sphi 0, %s120
      %s138 = sphi 0, %s138
      %s140 = sphi 0, %s138
      %s141 = sphi 0, %s140
      %s155 = sphi 0, %s141
      %s159 = sphi 0, %s159
      %s161 = sphi 0, %s159
      %s162 = sphi 0, %s161
      %s176 = sphi 0, %s162
      %s180 = sphi 0, %s180
      %s182 = sphi 0, %s180
      %s183 = sphi 0, %s182
      %s197 = sphi 0, %s183
      %s201 = sphi 0, %s201
      %s203 = sphi 0, %s201
      %s204 = sphi 0, %s203
      %s218 = sphi 0, %s204
      %s224 = sphi 0, %s226
      %s227 = sphi 0, %s224
      %s228 = sphi 0, %s227
      %s244 = sphi 0, %s228
    $region4: #{tpu_custom_call.1} parent=1 // loop_header_branch
      %23 = sbr.rel (%p21) target = $region8
    $region5: #{tpu_custom_call.1} parent=1 // loop_body
      %s25 = ssub.s32 %s20, 1
      %s26 = ssub.s32 %s20, 2
      %s27 = sadd.s32 %s20, 1
      %s28 = ssub.s32 %s20, %s27
      %p29 = scmp.eq.s32.totalorder %s28, 0
      %s31 = sadd.s32 %s30, 1
      %s32 = scalar_select %p29, %s30, %s31
      %p35 = pneg %p29
      %p36 = scmp.eq.s32.totalorder %s20, 3
      %p37 = por %p35, %p36
      %p38 = scmp.ne.s32.totalorder %s30, %s33
      %p39 = scmp.eq.s32.totalorder %s20, 0
      %p40 = por %p38, %p39
      %p41 = scmp.ne.s32.totalorder %s30, %s33
      %p42 = scmp.eq.s32.totalorder %s25, 3
      %p43 = por %p41, %p42
      %p44 = scmp.ne.s32.totalorder %s33, %s34
      %p45 = scmp.eq.s32.totalorder %s25, 0
      %p46 = por %p44, %p45
      %p47 = scmp.ne.s32.totalorder %s33, %s34
      %p48 = scmp.eq.s32.totalorder %s26, 3
      %p49 = por %p47, %p48
      %p51 = scmp.ne.s32.totalorder %s34, %s50
      %p52 = scmp.eq.s32.totalorder %s26, 0
      %p53 = por %p51, %p52
      %s55 = sadd.s32 %s54, 1
      %p58 = scmp.eq.s32.totalorder %s20, 3
      %p59 = scmp.ne.s32.totalorder %s54, %s56
      %p60 = scmp.eq.s32.totalorder %s20, 0
      %p61 = por %p59, %p60
      %p62 = scmp.ne.s32.totalorder %s54, %s56
      %p63 = scmp.eq.s32.totalorder %s25, 3
      %p64 = por %p62, %p63
      %p65 = scmp.ne.s32.totalorder %s56, %s57
      %p66 = scmp.eq.s32.totalorder %s25, 0
      %p67 = por %p65, %p66
      %p68 = scmp.ne.s32.totalorder %s56, %s57
      %p69 = scmp.eq.s32.totalorder %s26, 3
      %p70 = por %p68, %p69
      %p72 = scmp.ne.s32.totalorder %s57, %s71
      %p73 = scmp.eq.s32.totalorder %s26, 0
      %p74 = por %p72, %p73
      %s76 = sadd.s32 %s75, 1
      %p79 = scmp.eq.s32.totalorder %s20, 3
      %p80 = scmp.ne.s32.totalorder %s75, %s77
      %p81 = scmp.eq.s32.totalorder %s20, 0
      %p82 = por %p80, %p81
      %p83 = scmp.ne.s32.totalorder %s75, %s77
      %p84 = scmp.eq.s32.totalorder %s25, 3
      %p85 = por %p83, %p84
      %p86 = scmp.ne.s32.totalorder %s77, %s78
      %p87 = scmp.eq.s32.totalorder %s25, 0
      %p88 = por %p86, %p87
      %p89 = scmp.ne.s32.totalorder %s77, %s78
      %p90 = scmp.eq.s32.totalorder %s26, 3
      %p91 = por %p89, %p90
      %p93 = scmp.ne.s32.totalorder %s78, %s92
      %p94 = scmp.eq.s32.totalorder %s26, 0
      %p95 = por %p93, %p94
      %s97 = sadd.s32 %s96, 1
      %p100 = scmp.eq.s32.totalorder %s20, 3
      %p101 = scmp.ne.s32.totalorder %s96, %s98
      %p102 = scmp.eq.s32.totalorder %s20, 0
      %p103 = por %p101, %p102
      %p104 = scmp.ne.s32.totalorder %s96, %s98
      %p105 = scmp.eq.s32.totalorder %s25, 3
      %p106 = por %p104, %p105
      %p107 = scmp.ne.s32.totalorder %s98, %s99
      %p108 = scmp.eq.s32.totalorder %s25, 0
      %p109 = por %p107, %p108
      %p110 = scmp.ne.s32.totalorder %s98, %s99
      %p111 = scmp.eq.s32.totalorder %s26, 3
      %p112 = por %p110, %p111
      %p114 = scmp.ne.s32.totalorder %s99, %s113
      %p115 = scmp.eq.s32.totalorder %s26, 0
      %p116 = por %p114, %p115
      %s118 = sadd.s32 %s117, 1
      %p121 = scmp.eq.s32.totalorder %s20, 3
      %p122 = scmp.ne.s32.totalorder %s117, %s119
      %p123 = scmp.eq.s32.totalorder %s20, 0
      %p124 = por %p122, %p123
      %p125 = scmp.ne.s32.totalorder %s117, %s119
      %p126 = scmp.eq.s32.totalorder %s25, 3
      %p127 = por %p125, %p126
      %p128 = scmp.ne.s32.totalorder %s119, %s120
      %p129 = scmp.eq.s32.totalorder %s25, 0
      %p130 = por %p128, %p129
      %p131 = scmp.ne.s32.totalorder %s119, %s120
      %p132 = scmp.eq.s32.totalorder %s26, 3
      %p133 = por %p131, %p132
      %p135 = scmp.ne.s32.totalorder %s120, %s134
      %p136 = scmp.eq.s32.totalorder %s26, 0
      %p137 = por %p135, %p136
      %s139 = sadd.s32 %s138, 1
      %p142 = scmp.eq.s32.totalorder %s20, 3
      %p143 = scmp.ne.s32.totalorder %s138, %s140
      %p144 = scmp.eq.s32.totalorder %s20, 0
      %p145 = por %p143, %p144
      %p146 = scmp.ne.s32.totalorder %s138, %s140
      %p147 = scmp.eq.s32.totalorder %s25, 3
      %p148 = por %p146, %p147
      %p149 = scmp.ne.s32.totalorder %s140, %s141
      %p150 = scmp.eq.s32.totalorder %s25, 0
      %p151 = por %p149, %p150
      %p152 = scmp.ne.s32.totalorder %s140, %s141
      %p153 = scmp.eq.s32.totalorder %s26, 3
      %p154 = por %p152, %p153
      %p156 = scmp.ne.s32.totalorder %s141, %s155
      %p157 = scmp.eq.s32.totalorder %s26, 0
      %p158 = por %p156, %p157
      %s160 = sadd.s32 %s159, 1
      %p163 = scmp.eq.s32.totalorder %s20, 3
      %p164 = scmp.ne.s32.totalorder %s159, %s161
      %p165 = scmp.eq.s32.totalorder %s20, 0
      %p166 = por %p164, %p165
      %p167 = scmp.ne.s32.totalorder %s159, %s161
      %p168 = scmp.eq.s32.totalorder %s25, 3
      %p169 = por %p167, %p168
      %p170 = scmp.ne.s32.totalorder %s161, %s162
      %p171 = scmp.eq.s32.totalorder %s25, 0
      %p172 = por %p170, %p171
      %p173 = scmp.ne.s32.totalorder %s161, %s162
      %p174 = scmp.eq.s32.totalorder %s26, 3
      %p175 = por %p173, %p174
      %p177 = scmp.ne.s32.totalorder %s162, %s176
      %p178 = scmp.eq.s32.totalorder %s26, 0
      %p179 = por %p177, %p178
      %s181 = sadd.s32 %s180, 1
      %p184 = scmp.eq.s32.totalorder %s20, 3
      %p185 = scmp.ne.s32.totalorder %s180, %s182
      %p186 = scmp.eq.s32.totalorder %s20, 0
      %p187 = por %p185, %p186
      %p188 = scmp.ne.s32.totalorder %s180, %s182
      %p189 = scmp.eq.s32.totalorder %s25, 3
      %p190 = por %p188, %p189
      %p191 = scmp.ne.s32.totalorder %s182, %s183
      %p192 = scmp.eq.s32.totalorder %s25, 0
      %p193 = por %p191, %p192
      %p194 = scmp.ne.s32.totalorder %s182, %s183
      %p195 = scmp.eq.s32.totalorder %s26, 3
      %p196 = por %p194, %p195
      %p198 = scmp.ne.s32.totalorder %s183, %s197
      %p199 = scmp.eq.s32.totalorder %s26, 0
      %p200 = por %p198, %p199
      %s202 = sadd.s32 %s201, 1
      %p205 = scmp.eq.s32.totalorder %s20, 3
      %p206 = scmp.ne.s32.totalorder %s201, %s203
      %p207 = scmp.eq.s32.totalorder %s20, 0
      %p208 = por %p206, %p207
      %p209 = scmp.ne.s32.totalorder %s201, %s203
      %p210 = scmp.eq.s32.totalorder %s25, 3
      %p211 = por %p209, %p210
      %p212 = scmp.ne.s32.totalorder %s203, %s204
      %p213 = scmp.eq.s32.totalorder %s25, 0
      %p214 = por %p212, %p213
      %p215 = scmp.ne.s32.totalorder %s203, %s204
      %p216 = scmp.eq.s32.totalorder %s26, 3
      %p217 = por %p215, %p216
      %p219 = scmp.ne.s32.totalorder %s204, %s218
      %p220 = scmp.eq.s32.totalorder %s26, 0
      %p221 = por %p219, %p220
      %s222 = ssub.s32 %s20, %s27
      %p223 = scmp.eq.s32.totalorder %s222, 0
      %s225 = sadd.s32 %s224, 1
      %s226 = scalar_select %p223, %s224, %s225
      %p229 = pneg %p223
      %p230 = scmp.eq.s32.totalorder %s20, 3
      %p231 = por %p229, %p230
      %p232 = scmp.ne.s32.totalorder %s224, %s227
      %p233 = scmp.eq.s32.totalorder %s20, 0
      %p234 = por %p232, %p233
      %p235 = scmp.ne.s32.totalorder %s224, %s227
      %p236 = scmp.eq.s32.totalorder %s25, 3
      %p237 = por %p235, %p236
      %p238 = scmp.ne.s32.totalorder %s227, %s228
      %p239 = scmp.eq.s32.totalorder %s25, 0
      %p240 = por %p238, %p239
      %p241 = scmp.ne.s32.totalorder %s227, %s228
      %p242 = scmp.eq.s32.totalorder %s26, 3
      %p243 = por %p241, %p242
      %p245 = scmp.ne.s32.totalorder %s228, %s244
      %p246 = scmp.eq.s32.totalorder %s26, 0
      %p247 = por %p245, %p246
      %p248 = scmp.le.s32.totalorder 1, %s20
      %p249 = scmp.lt.s32.totalorder %s20, 5
      %p250 = pnand %p248, %p249
      %p251 = pneg %p250
      // Predicated region
      $region9: #{tpu_custom_call.1} parent=5 // pred_check
        _
      $region10: #{tpu_custom_call.1} parent=5 // pred_check_branch
        %253 = sbr.rel (%p250) target = $region12
      $region11: #{tpu_custom_call.1} parent=5 // pred_region
        %s254 = ssub.s32 %s20, 1
        // Predicated region
        $region13: #{tpu_custom_call.1} parent=11 // pred_check
          %p255 = pneg %p67
        $region14: #{tpu_custom_call.1} parent=11 // pred_check_branch
          %257 = sbr.rel (%p255) target = $region16
        $region15: #{tpu_custom_call.1} parent=11 // pred_region
          _
        $region16: #{tpu_custom_call.1} parent=11 // pred_fallthru
          _
        // Predicated region
        $region17: #{tpu_custom_call.1} parent=11 // pred_check
          %p258 = pneg %p88
        $region18: #{tpu_custom_call.1} parent=11 // pred_check_branch
          %260 = sbr.rel (%p258) target = $region20
        $region19: #{tpu_custom_call.1} parent=11 // pred_region
          _
        $region20: #{tpu_custom_call.1} parent=11 // pred_fallthru
          _
        // Predicated region
        $region21: #{tpu_custom_call.1} parent=11 // pred_check
          %p261 = pneg %p109
        $region22: #{tpu_custom_call.1} parent=11 // pred_check_branch
          %263 = sbr.rel (%p261) target = $region24
        $region23: #{tpu_custom_call.1} parent=11 // pred_region
          _
        $region24: #{tpu_custom_call.1} parent=11 // pred_fallthru
          _
        // Predicated region
        $region25: #{tpu_custom_call.1} parent=11 // pred_check
          %p264 = pneg %p130
        $region26: #{tpu_custom_call.1} parent=11 // pred_check_branch
          %266 = sbr.rel (%p264) target = $region28
        $region27: #{tpu_custom_call.1} parent=11 // pred_region
          _
        $region28: #{tpu_custom_call.1} parent=11 // pred_fallthru
          _
        // Predicated region
        $region29: #{tpu_custom_call.1} parent=11 // pred_check
          %p267 = pneg %p151
        $region30: #{tpu_custom_call.1} parent=11 // pred_check_branch
          %269 = sbr.rel (%p267) target = $region32
        $region31: #{tpu_custom_call.1} parent=11 // pred_region
          _
        $region32: #{tpu_custom_call.1} parent=11 // pred_fallthru
          _
        // Predicated region
        $region33: #{tpu_custom_call.1} parent=11 // pred_check
          %p270 = pneg %p172
        $region34: #{tpu_custom_call.1} parent=11 // pred_check_branch
          %272 = sbr.rel (%p270) target = $region36
        $region35: #{tpu_custom_call.1} parent=11 // pred_region
          _
        $region36: #{tpu_custom_call.1} parent=11 // pred_fallthru
          _
        // Predicated region
        $region37: #{tpu_custom_call.1} parent=11 // pred_check
          %p273 = pneg %p193
        $region38: #{tpu_custom_call.1} parent=11 // pred_check_branch
          %275 = sbr.rel (%p273) target = $region40
        $region39: #{tpu_custom_call.1} parent=11 // pred_region
          _
        $region40: #{tpu_custom_call.1} parent=11 // pred_fallthru
          _
        // Predicated region
        $region41: #{tpu_custom_call.1} parent=11 // pred_check
          %p276 = pneg %p214
        $region42: #{tpu_custom_call.1} parent=11 // pred_check_branch
          %278 = sbr.rel (%p276) target = $region44
        $region43: #{tpu_custom_call.1} parent=11 // pred_region
          _
        $region44: #{tpu_custom_call.1} parent=11 // pred_fallthru
          _
      $region12: #{tpu_custom_call.1} parent=5 // pred_fallthru
        _
      %p279 = scmp.lt.s32.totalorder %s20, 4
      // Predicated region
      $region45: #{tpu_custom_call.1} parent=5 // pred_check
        %p280 = pneg %p279
      $region46: #{tpu_custom_call.1} parent=5 // pred_check_branch
        %282 = sbr.rel (%p280) target = $region48
      $region47: #{tpu_custom_call.1} parent=5 // pred_region
        // Predicated region
        $region49: #{tpu_custom_call.1} parent=47 // pred_check
          %p283 = pneg %p40
        $region50: #{tpu_custom_call.1} parent=47 // pred_check_branch
          %285 = sbr.rel (%p283) target = $region52
        $region51: #{tpu_custom_call.1} parent=47 // pred_region
          %s286 = smul.u32 2, %s20
          %p287 = scmp.lt.s32.totalorder %s286, 7
          %s288 = scalar_select %p287, %s286, 7
          %s289 = scalar_lea.vmem %s0, %s288
          %s290 = smul.u32 2, %s20
        $region52: #{tpu_custom_call.1} parent=47 // pred_fallthru
          _
      $region48: #{tpu_custom_call.1} parent=5 // pred_fallthru
        _
      %p291 = scmp.le.s32.totalorder 1, %s20
      %p292 = scmp.lt.s32.totalorder %s20, 5
      %p293 = pnand %p291, %p292
      %p294 = pneg %p293
      // Predicated region
      $region53: #{tpu_custom_call.1} parent=5 // pred_check
        _
      $region54: #{tpu_custom_call.1} parent=5 // pred_check_branch
        %296 = sbr.rel (%p293) target = $region56
      $region55: #{tpu_custom_call.1} parent=5 // pred_region
        %s297 = ssub.s32 %s20, 1
        %s298 = smul.u32 2, %s25
        %p299 = scmp.lt.s32.totalorder %s298, 7
        %s300 = scalar_select %p299, %s298, 7
        %s301 = scalar_lea.vmem %s0, %s300
        %p302 = pneg %p46
        %p303 = pneg %p43
        %p304 = pneg %p67
        %p305 = pneg %p64
        %p306 = pneg %p88
        %p307 = pneg %p85
        %p308 = pneg %p109
        %p309 = pneg %p106
        %p310 = pneg %p130
        %p311 = pneg %p127
        %p312 = pneg %p151
        %p313 = pneg %p148
        %p314 = pneg %p172
        %p315 = pneg %p169
        %p316 = pneg %p193
        %p317 = pneg %p190
        %p318 = pneg %p214
        %p319 = pneg %p211
        %p320 = pneg %p240
        %p321 = pneg %p237
        %s322 = sand.u32 %s227, 1
        %s323 = scalar_lea.sflag [#allocation4], %s322
        %s324 = sand.u32 %s227, 1
        %s325 = smul.addr %s324, 2
        %s326 = scalar_lea.vmem [#allocation3], %s325
        %s327 = smul.u32 2, %s25
        %p328 = scmp.lt.s32.totalorder %s327, 7
        %s329 = scalar_select %p328, %s327, 7
        %s330 = scalar_lea.vmem %s0, %s329
        %s331 = smul.u32 2, %s25
        %s332 = smul.u32 2, %s25
        %v333 = vld [vmem:[%s330] sm:$0x3]
        %v334 = vld [vmem:[%s1] sm:$0xff]
        %v335 = vld [vmem:[%s1 + $0x8] sm:$0xff]
        %337 = vset.pattern.permute.xlu0 0
        %338 = vperm.xlu0 %337, %v334
        %v339 = vpop.permute.xlu0 %338
        %342 = vset.pattern.permute.xlu0 0
        %343 = vperm.xlu0 %342, %v335
        %v344 = vpop.permute.xlu0 %343
        %v347 = vlaneseq
        %v348 = vshrl.u32 %v347, 7
        %v349 = vsub.s32 0, %v348
        %v350 = vrot.slane %v333, %v349
        %v351 = vlaneseq
        %v352 = vshrl.u32 %v351, 7
        %v353 = vsub.s32 1, %v352
        %v354 = vrot.slane %v333, %v353
        %v357 = vmul.f32 %v339, %v350
        %v358 = vmul.f32 %v339, %v354
        %v359 = vmul.f32 %v344, %v350
        %v360 = vmul.f32 %v344, %v354
        %v361 = vld [vmem:[%s2] sm:$0xff]
        %v362 = vld [vmem:[%s2 + $0x8] sm:$0xff]
        %364 = vset.pattern.permute.xlu0 0
        %365 = vperm.xlu0 %364, %v361
        %v366 = vpop.permute.xlu0 %365
        %369 = vset.pattern.permute.xlu0 0
        %370 = vperm.xlu0 %369, %v362
        %v371 = vpop.permute.xlu0 %370
        %v373 = vadd.f32 %v357, %v366
        %v374 = vadd.f32 %v358, %v366
        %v375 = vadd.f32 %v359, %v371
        %v376 = vadd.f32 %v360, %v371
        %v377 = vmax.f32 %v373, 0.0
        %v378 = vmax.f32 %v374, 0.0
        %v379 = vmax.f32 %v375, 0.0
        %v380 = vmax.f32 %v376, 0.0
        %v381 = vld [vmem:[%s3] sm:$0xff]
        %v382 = vld [vmem:[%s4] sm:$0xff]
        %384 = vset.pattern.permute.xlu0 0
        %385 = vperm.xlu0 %384, %v381
        %v386 = vpop.permute.xlu0 %385
        %v388 = vlaneseq
        %v389 = vshrl.u32 %v388, 7
        %v390 = vsub.s32 0, %v389
        %v391 = vrot.slane %v377, %v390
        %v392 = vlaneseq
        %v393 = vshrl.u32 %v392, 7
        %v394 = vsub.s32 0, %v393
        %v395 = vrot.slane %v378, %v394
        %v396 = vmul.f32 %v386, %v391
        %v397 = vmul.f32 %v386, %v395
        %398 = vset.pattern.permute.xlu0 1
        %399 = vperm.xlu0 %398, %v381
        %v400 = vpop.permute.xlu0 %399
        %v402 = vlaneseq
        %v403 = vshrl.u32 %v402, 7
        %v404 = vsub.s32 1, %v403
        %v405 = vrot.slane %v377, %v404
        %v406 = vlaneseq
        %v407 = vshrl.u32 %v406, 7
        %v408 = vsub.s32 1, %v407
        %v409 = vrot.slane %v378, %v408
        %v410 = vmul.f32 %v400, %v405
        %v411 = vmul.f32 %v400, %v409
        %v412 = vadd.f32 %v396, %v410
        %v413 = vadd.f32 %v397, %v411
        %414 = vset.pattern.permute.xlu0 2
        %415 = vperm.xlu0 %414, %v381
        %v416 = vpop.permute.xlu0 %415
        %v418 = vlaneseq
        %v419 = vshrl.u32 %v418, 7
        %v420 = vsub.s32 2, %v419
        %v421 = vrot.slane %v377, %v420
        %v422 = vlaneseq
        %v423 = vshrl.u32 %v422, 7
        %v424 = vsub.s32 2, %v423
        %v425 = vrot.slane %v378, %v424
        %v426 = vmul.f32 %v416, %v421
        %v427 = vmul.f32 %v416, %v425
        %v428 = vadd.f32 %v412, %v426
        %v429 = vadd.f32 %v413, %v427
        %430 = vset.pattern.permute.xlu0 3
        %431 = vperm.xlu0 %430, %v381
        %v432 = vpop.permute.xlu0 %431
        %v434 = vlaneseq
        %v435 = vshrl.u32 %v434, 7
        %v436 = vsub.s32 3, %v435
        %v437 = vrot.slane %v377, %v436
        %v438 = vlaneseq
        %v439 = vshrl.u32 %v438, 7
        %v440 = vsub.s32 3, %v439
        %v441 = vrot.slane %v378, %v440
        %v442 = vmul.f32 %v432, %v437
        %v443 = vmul.f32 %v432, %v441
        %v444 = vadd.f32 %v428, %v442
        %v445 = vadd.f32 %v429, %v443
        %446 = vset.pattern.permute.xlu0 4
        %447 = vperm.xlu0 %446, %v381
        %v448 = vpop.permute.xlu0 %447
        %v450 = vlaneseq
        %v451 = vshrl.u32 %v450, 7
        %v452 = vsub.s32 4, %v451
        %v453 = vrot.slane %v377, %v452
        %v454 = vlaneseq
        %v455 = vshrl.u32 %v454, 7
        %v456 = vsub.s32 4, %v455
        %v457 = vrot.slane %v378, %v456
        %v458 = vmul.f32 %v448, %v453
        %v459 = vmul.f32 %v448, %v457
        %v460 = vadd.f32 %v444, %v458
        %v461 = vadd.f32 %v445, %v459
        %462 = vset.pattern.permute.xlu0 5
        %463 = vperm.xlu0 %462, %v381
        %v464 = vpop.permute.xlu0 %463
        %v466 = vlaneseq
        %v467 = vshrl.u32 %v466, 7
        %v468 = vsub.s32 5, %v467
        %v469 = vrot.slane %v377, %v468
        %v470 = vlaneseq
        %v471 = vshrl.u32 %v470, 7
        %v472 = vsub.s32 5, %v471
        %v473 = vrot.slane %v378, %v472
        %v474 = vmul.f32 %v464, %v469
        %v475 = vmul.f32 %v464, %v473
        %v476 = vadd.f32 %v460, %v474
        %v477 = vadd.f32 %v461, %v475
        %478 = vset.pattern.permute.xlu0 6
        %479 = vperm.xlu0 %478, %v381
        %v480 = vpop.permute.xlu0 %479
        %v482 = vlaneseq
        %v483 = vshrl.u32 %v482, 7
        %v484 = vsub.s32 6, %v483
        %v485 = vrot.slane %v377, %v484
        %v486 = vlaneseq
        %v487 = vshrl.u32 %v486, 7
        %v488 = vsub.s32 6, %v487
        %v489 = vrot.slane %v378, %v488
        %v490 = vmul.f32 %v480, %v485
        %v491 = vmul.f32 %v480, %v489
        %v492 = vadd.f32 %v476, %v490
        %v493 = vadd.f32 %v477, %v491
        %494 = vset.pattern.permute.xlu0 7
        %495 = vperm.xlu0 %494, %v381
        %v496 = vpop.permute.xlu0 %495
        %v498 = vlaneseq
        %v499 = vshrl.u32 %v498, 7
        %v500 = vsub.s32 7, %v499
        %v501 = vrot.slane %v377, %v500
        %v502 = vlaneseq
        %v503 = vshrl.u32 %v502, 7
        %v504 = vsub.s32 7, %v503
        %v505 = vrot.slane %v378, %v504
        %v506 = vmul.f32 %v496, %v501
        %v507 = vmul.f32 %v496, %v505
        %v508 = vadd.f32 %v492, %v506
        %v509 = vadd.f32 %v493, %v507
        %510 = vset.pattern.permute.xlu0 8
        %511 = vperm.xlu0 %510, %v381
        %v512 = vpop.permute.xlu0 %511
        %v514 = vlaneseq
        %v515 = vshrl.u32 %v514, 7
        %v516 = vsub.s32 0, %v515
        %v517 = vrot.slane %v379, %v516
        %v518 = vlaneseq
        %v519 = vshrl.u32 %v518, 7
        %v520 = vsub.s32 0, %v519
        %v521 = vrot.slane %v380, %v520
        %v522 = vmul.f32 %v512, %v517
        %v523 = vmul.f32 %v512, %v521
        %v524 = vadd.f32 %v508, %v522
        %v525 = vadd.f32 %v509, %v523
        %526 = vset.pattern.permute.xlu0 9
        %527 = vperm.xlu0 %526, %v381
        %v528 = vpop.permute.xlu0 %527
        %v530 = vlaneseq
        %v531 = vshrl.u32 %v530, 7
        %v532 = vsub.s32 1, %v531
        %v533 = vrot.slane %v379, %v532
        %v534 = vlaneseq
        %v535 = vshrl.u32 %v534, 7
        %v536 = vsub.s32 1, %v535
        %v537 = vrot.slane %v380, %v536
        %v538 = vmul.f32 %v528, %v533
        %v539 = vmul.f32 %v528, %v537
        %v540 = vadd.f32 %v524, %v538
        %v541 = vadd.f32 %v525, %v539
        %542 = vset.pattern.permute.xlu0 10
        %543 = vperm.xlu0 %542, %v381
        %v544 = vpop.permute.xlu0 %543
        %v546 = vlaneseq
        %v547 = vshrl.u32 %v546, 7
        %v548 = vsub.s32 2, %v547
        %v549 = vrot.slane %v379, %v548
        %v550 = vlaneseq
        %v551 = vshrl.u32 %v550, 7
        %v552 = vsub.s32 2, %v551
        %v553 = vrot.slane %v380, %v552
        %v554 = vmul.f32 %v544, %v549
        %v555 = vmul.f32 %v544, %v553
        %v556 = vadd.f32 %v540, %v554
        %v557 = vadd.f32 %v541, %v555
        %558 = vset.pattern.permute.xlu0 11
        %559 = vperm.xlu0 %558, %v381
        %v560 = vpop.permute.xlu0 %559
        %v562 = vlaneseq
        %v563 = vshrl.u32 %v562, 7
        %v564 = vsub.s32 3, %v563
        %v565 = vrot.slane %v379, %v564
        %v566 = vlaneseq
        %v567 = vshrl.u32 %v566, 7
        %v568 = vsub.s32 3, %v567
        %v569 = vrot.slane %v380, %v568
        %v570 = vmul.f32 %v560, %v565
        %v571 = vmul.f32 %v560, %v569
        %v572 = vadd.f32 %v556, %v570
        %v573 = vadd.f32 %v557, %v571
        %574 = vset.pattern.permute.xlu0 12
        %575 = vperm.xlu0 %574, %v381
        %v576 = vpop.permute.xlu0 %575
        %v578 = vlaneseq
        %v579 = vshrl.u32 %v578, 7
        %v580 = vsub.s32 4, %v579
        %v581 = vrot.slane %v379, %v580
        %v582 = vlaneseq
        %v583 = vshrl.u32 %v582, 7
        %v584 = vsub.s32 4, %v583
        %v585 = vrot.slane %v380, %v584
        %v586 = vmul.f32 %v576, %v581
        %v587 = vmul.f32 %v576, %v585
        %v588 = vadd.f32 %v572, %v586
        %v589 = vadd.f32 %v573, %v587
        %590 = vset.pattern.permute.xlu0 13
        %591 = vperm.xlu0 %590, %v381
        %v592 = vpop.permute.xlu0 %591
        %v594 = vlaneseq
        %v595 = vshrl.u32 %v594, 7
        %v596 = vsub.s32 5, %v595
        %v597 = vrot.slane %v379, %v596
        %v598 = vlaneseq
        %v599 = vshrl.u32 %v598, 7
        %v600 = vsub.s32 5, %v599
        %v601 = vrot.slane %v380, %v600
        %v602 = vmul.f32 %v592, %v597
        %v603 = vmul.f32 %v592, %v601
        %v604 = vadd.f32 %v588, %v602
        %v605 = vadd.f32 %v589, %v603
        %606 = vset.pattern.permute.xlu0 14
        %607 = vperm.xlu0 %606, %v381
        %v608 = vpop.permute.xlu0 %607
        %v610 = vlaneseq
        %v611 = vshrl.u32 %v610, 7
        %v612 = vsub.s32 6, %v611
        %v613 = vrot.slane %v379, %v612
        %v614 = vlaneseq
        %v615 = vshrl.u32 %v614, 7
        %v616 = vsub.s32 6, %v615
        %v617 = vrot.slane %v380, %v616
        %v618 = vmul.f32 %v608, %v613
        %v619 = vmul.f32 %v608, %v617
        %v620 = vadd.f32 %v604, %v618
        %v621 = vadd.f32 %v605, %v619
        %622 = vset.pattern.permute.xlu0 15
        %623 = vperm.xlu0 %622, %v381
        %v624 = vpop.permute.xlu0 %623
        %v626 = vlaneseq
        %v627 = vshrl.u32 %v626, 7
        %v628 = vsub.s32 7, %v627
        %v629 = vrot.slane %v379, %v628
        %v630 = vlaneseq
        %v631 = vshrl.u32 %v630, 7
        %v632 = vsub.s32 7, %v631
        %v633 = vrot.slane %v380, %v632
        %v634 = vmul.f32 %v624, %v629
        %v635 = vmul.f32 %v624, %v633
        %v636 = vadd.f32 %v620, %v634
        %v637 = vadd.f32 %v621, %v635
        %639 = vset.pattern.permute.xlu0 0
        %640 = vperm.xlu0 %639, %v382
        %v641 = vpop.permute.xlu0 %640
        %v643 = vadd.f32 %v636, %v641
        %v644 = vadd.f32 %v637, %v641
        %v645 = vmax.f32 %v643, 0.0
        %v646 = vmax.f32 %v644, 0.0
        %v647 = vld [vmem:[%s5] sm:$0xf]
        %v648 = vld [vmem:[%s6] sm:$0xf]
        %650 = vset.pattern.permute.xlu0 0
        %651 = vperm.xlu0 %650, %v647
        %v652 = vpop.permute.xlu0 %651
        %v654 = vlaneseq
        %v655 = vshrl.u32 %v654, 7
        %v656 = vsub.s32 0, %v655
        %v657 = vrot.slane %v645, %v656
        %v658 = vlaneseq
        %v659 = vshrl.u32 %v658, 7
        %v660 = vsub.s32 0, %v659
        %v661 = vrot.slane %v646, %v660
        %v662 = vmul.f32 %v652, %v657
        %v663 = vmul.f32 %v652, %v661
        %664 = vset.pattern.permute.xlu0 1
        %665 = vperm.xlu0 %664, %v647
        %v666 = vpop.permute.xlu0 %665
        %v668 = vlaneseq
        %v669 = vshrl.u32 %v668, 7
        %v670 = vsub.s32 1, %v669
        %v671 = vrot.slane %v645, %v670
        %v672 = vlaneseq
        %v673 = vshrl.u32 %v672, 7
        %v674 = vsub.s32 1, %v673
        %v675 = vrot.slane %v646, %v674
        %v676 = vmul.f32 %v666, %v671
        %v677 = vmul.f32 %v666, %v675
        %v678 = vadd.f32 %v662, %v676
        %v679 = vadd.f32 %v663, %v677
        %680 = vset.pattern.permute.xlu0 2
        %681 = vperm.xlu0 %680, %v647
        %v682 = vpop.permute.xlu0 %681
        %v684 = vlaneseq
        %v685 = vshrl.u32 %v684, 7
        %v686 = vsub.s32 2, %v685
        %v687 = vrot.slane %v645, %v686
        %v688 = vlaneseq
        %v689 = vshrl.u32 %v688, 7
        %v690 = vsub.s32 2, %v689
        %v691 = vrot.slane %v646, %v690
        %v692 = vmul.f32 %v682, %v687
        %v693 = vmul.f32 %v682, %v691
        %v694 = vadd.f32 %v678, %v692
        %v695 = vadd.f32 %v679, %v693
        %696 = vset.pattern.permute.xlu0 3
        %697 = vperm.xlu0 %696, %v647
        %v698 = vpop.permute.xlu0 %697
        %v700 = vlaneseq
        %v701 = vshrl.u32 %v700, 7
        %v702 = vsub.s32 3, %v701
        %v703 = vrot.slane %v645, %v702
        %v704 = vlaneseq
        %v705 = vshrl.u32 %v704, 7
        %v706 = vsub.s32 3, %v705
        %v707 = vrot.slane %v646, %v706
        %v708 = vmul.f32 %v698, %v703
        %v709 = vmul.f32 %v698, %v707
        %v710 = vadd.f32 %v694, %v708
        %v711 = vadd.f32 %v695, %v709
        %712 = vset.pattern.permute.xlu0 4
        %713 = vperm.xlu0 %712, %v647
        %v714 = vpop.permute.xlu0 %713
        %v716 = vlaneseq
        %v717 = vshrl.u32 %v716, 7
        %v718 = vsub.s32 4, %v717
        %v719 = vrot.slane %v645, %v718
        %v720 = vlaneseq
        %v721 = vshrl.u32 %v720, 7
        %v722 = vsub.s32 4, %v721
        %v723 = vrot.slane %v646, %v722
        %v724 = vmul.f32 %v714, %v719
        %v725 = vmul.f32 %v714, %v723
        %v726 = vadd.f32 %v710, %v724
        %v727 = vadd.f32 %v711, %v725
        %728 = vset.pattern.permute.xlu0 5
        %729 = vperm.xlu0 %728, %v647
        %v730 = vpop.permute.xlu0 %729
        %v732 = vlaneseq
        %v733 = vshrl.u32 %v732, 7
        %v734 = vsub.s32 5, %v733
        %v735 = vrot.slane %v645, %v734
        %v736 = vlaneseq
        %v737 = vshrl.u32 %v736, 7
        %v738 = vsub.s32 5, %v737
        %v739 = vrot.slane %v646, %v738
        %v740 = vmul.f32 %v730, %v735
        %v741 = vmul.f32 %v730, %v739
        %v742 = vadd.f32 %v726, %v740
        %v743 = vadd.f32 %v727, %v741
        %744 = vset.pattern.permute.xlu0 6
        %745 = vperm.xlu0 %744, %v647
        %v746 = vpop.permute.xlu0 %745
        %v748 = vlaneseq
        %v749 = vshrl.u32 %v748, 7
        %v750 = vsub.s32 6, %v749
        %v751 = vrot.slane %v645, %v750
        %v752 = vlaneseq
        %v753 = vshrl.u32 %v752, 7
        %v754 = vsub.s32 6, %v753
        %v755 = vrot.slane %v646, %v754
        %v756 = vmul.f32 %v746, %v751
        %v757 = vmul.f32 %v746, %v755
        %v758 = vadd.f32 %v742, %v756
        %v759 = vadd.f32 %v743, %v757
        %760 = vset.pattern.permute.xlu0 7
        %761 = vperm.xlu0 %760, %v647
        %v762 = vpop.permute.xlu0 %761
        %v764 = vlaneseq
        %v765 = vshrl.u32 %v764, 7
        %v766 = vsub.s32 7, %v765
        %v767 = vrot.slane %v645, %v766
        %v768 = vlaneseq
        %v769 = vshrl.u32 %v768, 7
        %v770 = vsub.s32 7, %v769
        %v771 = vrot.slane %v646, %v770
        %v772 = vmul.f32 %v762, %v767
        %v773 = vmul.f32 %v762, %v771
        %v774 = vadd.f32 %v758, %v772
        %v775 = vadd.f32 %v759, %v773
        %777 = vset.pattern.permute.xlu0 0
        %778 = vperm.xlu0 %777, %v648
        %v779 = vpop.permute.xlu0 %778
        %v781 = vadd.f32 %v774, %v779
        %v782 = vadd.f32 %v775, %v779
        %v783 = vmax.f32 %v781, 0.0
        %v784 = vmax.f32 %v782, 0.0
        %v785 = vld [vmem:[%s7] sm:$0x1]
        %v786 = vld [vmem:[#allocation2] sm:$0x1]
        %788 = vset.pattern.permute.xlu0 0
        %789 = vperm.xlu0 %788, %v785
        %v790 = vpop.permute.xlu0 %789
        %v792 = vlaneseq
        %v793 = vshrl.u32 %v792, 7
        %v794 = vsub.s32 0, %v793
        %v795 = vrot.slane %v790, %v794
        %v796 = vmul.f32 %v795, %v783
        %v797 = vmul.f32 %v795, %v784
        %798 = vset.pattern.permute.xlu0 1
        %799 = vperm.xlu0 %798, %v785
        %v800 = vpop.permute.xlu0 %799
        %v802 = vlaneseq
        %v803 = vshrl.u32 %v802, 7
        %v804 = vsub.s32 0, %v803
        %v805 = vrot.slane %v800, %v804
        %v806 = vmul.f32 %v805, %v783
        %v807 = vmul.f32 %v805, %v784
        %v810 = vrot.slane %v806, 1
        %v811 = vrot.slane %v807, 1
        %v814 = vadd.f32 %v796, %v810
        %v815 = vadd.f32 %v797, %v811
        %816 = vset.pattern.permute.xlu0 2
        %817 = vperm.xlu0 %816, %v785
        %v818 = vpop.permute.xlu0 %817
        %v820 = vlaneseq
        %v821 = vshrl.u32 %v820, 7
        %v822 = vsub.s32 0, %v821
        %v823 = vrot.slane %v818, %v822
        %v824 = vmul.f32 %v823, %v783
        %v825 = vmul.f32 %v823, %v784
        %v828 = vrot.slane %v824, 2
        %v829 = vrot.slane %v825, 2
        %v832 = vadd.f32 %v814, %v828
        %v833 = vadd.f32 %v815, %v829
        %834 = vset.pattern.permute.xlu0 3
        %835 = vperm.xlu0 %834, %v785
        %v836 = vpop.permute.xlu0 %835
        %v838 = vlaneseq
        %v839 = vshrl.u32 %v838, 7
        %v840 = vsub.s32 0, %v839
        %v841 = vrot.slane %v836, %v840
        %v842 = vmul.f32 %v841, %v783
        %v843 = vmul.f32 %v841, %v784
        %v846 = vrot.slane %v842, 3
        %v847 = vrot.slane %v843, 3
        %v850 = vadd.f32 %v832, %v846
        %v851 = vadd.f32 %v833, %v847
        %853 = vset.pattern.permute.xlu0 0
        %854 = vperm.xlu0 %853, %v786
        %v855 = vpop.permute.xlu0 %854
        %v857 = vlaneseq
        %v858 = vshrl.u32 %v857, 7
        %v859 = vsub.s32 0, %v858
        %v860 = vrot.slane %v855, %v859
        %v861 = vadd.f32 %v850, %v860
        %v862 = vadd.f32 %v851, %v860
        %v865 = vcombine.low %v861, %v862
        %v867 = vunpack.c.l.s4 1966171168
        %v868 = vunpack.c.0.s8 %v867
        %v869 = vlaneseq
        %v870 = vshrl.u32 %v869, 7
        %v871 = vsub.s32 %v868, %v870
        %v872 = vrot.slane %v865, %v871
        %v874 = vunpack.c.l.s4 1966171168
        %v875 = vunpack.c.0.s8 %v874
        %v876 = vlaneseq
        %v877 = vshrl.u32 %v876, 7
        %v878 = vsub.s32 %v875, %v877
        %v879 = vrot.slane %v872, %v878
        %v881 = vlaneseq
        %vm882 = vcmp.ge.s32.totalorder %v881, 0
        %vm883 = vcmp.lt.s32.totalorder %v881, 256
        %vm884 = vmand %vm882, %vm883
        %885 = vst.msk [vmem:[%s326] sm:$0x3] %vm884, %v879
        %s886 = sand.u32 %s227, 1
        %s887 = scalar_lea.sflag [#allocation4], %s886
        %s888 = sand.u32 %s227, 1
        %s889 = smul.addr %s888, 2
        %s890 = scalar_lea.vmem [#allocation3], %s889
        // Predicated region
        $region57: #{tpu_custom_call.1} parent=55 // pred_check
          %p891 = pneg %p237
        $region58: #{tpu_custom_call.1} parent=55 // pred_check_branch
          %893 = sbr.rel (%p891) target = $region60
        $region59: #{tpu_custom_call.1} parent=55 // pred_region
          %s894 = smul.u32 2, %s25
          %s896 = ssub.s32 32, 32
          %897 = vsyncadd %s887, %s896
          %s898 = smul.addr %s894, 16
          %s899 = scalar_lea.hbm %s9, %s898
          %s901 = sshll.u32 %s890, 4
          %s902 = int_to_ptr.vmem [resolvable:$true] %s901
          %904 = dma.vmem_to_hbm [thread:$0]  %s902, 32, %s899, %s887
        $region60: #{tpu_custom_call.1} parent=55 // pred_fallthru
          _
      $region56: #{tpu_custom_call.1} parent=5 // pred_fallthru
        _
      %p905 = scmp.le.s32.totalorder 2, %s20
      // Predicated region
      $region61: #{tpu_custom_call.1} parent=5 // pred_check
        %p906 = pneg %p905
      $region62: #{tpu_custom_call.1} parent=5 // pred_check_branch
        %908 = sbr.rel (%p906) target = $region64
      $region63: #{tpu_custom_call.1} parent=5 // pred_region
        %s909 = ssub.s32 %s20, 2
        // Predicated region
        $region65: #{tpu_custom_call.1} parent=63 // pred_check
          %p910 = pneg %p243
        $region66: #{tpu_custom_call.1} parent=63 // pred_check_branch
          %912 = sbr.rel (%p910) target = $region68
        $region67: #{tpu_custom_call.1} parent=63 // pred_region
          %s913 = sand.u32 %s228, 1
          %s914 = scalar_lea.sflag [#allocation4], %s913
          %s915 = sand.u32 %s228, 1
          %s916 = smul.addr %s915, 2
          %s917 = scalar_lea.vmem [#allocation3], %s916
          %918 = dma.done %s914, 32
        $region68: #{tpu_custom_call.1} parent=63 // pred_fallthru
          _
      $region64: #{tpu_custom_call.1} parent=5 // pred_fallthru
        _
    $region6: #{tpu_custom_call.1} parent=1 // loop_footer
      %s24 = sadd.s32 1, %s20
    $region7: #{tpu_custom_call.1} parent=1 // loop_footer_branch
      %19 = sbr.rel target = $region3
    $region8: #{tpu_custom_call.1} parent=1 // loop_exit
      _
    %919 = vsyncpa [#allocation4], 1
    %s920 = scalar_lea.sflag [#allocation4], 1
    %921 = vsyncpa %s920, 1

</llo_original>
